<compile_context>
chip_gen: v7x
topology: tpu7x:2x2x1
jax: 0.10.0
libtpu: 0.0.40
codegen_flags: <defaults>
</compile_context>

<pallas_src>
import functools

import jax
import jax.numpy as jnp
from jax.experimental import pallas as pl
from jax.experimental.pallas import tpu as pltpu

_INV_SQRT2 = 0.7071067811865476


def _ffn_kernel(x_ref, w1_ref, b1_ref, w2_ref, b2_ref, o_ref, acc_ref):
    # x_ref:  (TM, dim)
    # w1_ref: (dim, TH)    b1_ref: (1, TH)   [f32]
    # w2_ref: (TH, dim)    b2_ref: (1, dim)  [f32]
    # acc_ref: (TM, dim) f32 scratch, accumulates over the hidden axis.
    k = pl.program_id(1)

    @pl.when(k == 0)
    def _init():
        acc_ref[...] = jnp.zeros_like(acc_ref)

    # First linear on this hidden chunk: native-dtype operands, f32 accumulate.
    h = jnp.dot(x_ref[...], w1_ref[...], preferred_element_type=jnp.float32)
    h = h + b1_ref[...]                                   # b1 pre-cast to f32

    # Exact GELU (PyTorch nn.GELU default, approximate='none'), in f32.
    g = 0.5 * h * (1.0 + jax.lax.erf(h * _INV_SQRT2))

    # Dropout(p=0.0) is the identity (module default).
    # TODO(synk): training-mode dropout with p > 0 would need pltpu.prng_* masking.

    # Second linear: accumulate this hidden chunk's contribution in f32.
    acc_ref[...] += jnp.dot(g.astype(w2_ref.dtype), w2_ref[...],
                            preferred_element_type=jnp.float32)

    @pl.when(k == pl.num_programs(1) - 1)
    def _finalize():
        o_ref[...] = (acc_ref[...] + b2_ref[...]).astype(o_ref.dtype)


def _round_up(x, mult):
    return ((x + mult - 1) // mult) * mult


@functools.lru_cache(maxsize=1)
def _vmem_capacity_bytes():
    try:
        cap = int(pltpu.get_tpu_info().vmem_capacity_bytes)
        if cap > 0:
            return cap
    except Exception:
        pass
    return 64 * 1024 * 1024  # conservative (v7x-sized) fallback


def _footprint_bytes(tm, th, nh, dim, x_isz, w_isz):
    """VMEM footprint model matching the actual buffer counts used below."""
    w_buf = 1 if nh == 1 else 2                 # Buffered(1) when weights resident
    weights = 2 * dim * th * w_isz * w_buf      # w1 (dim,TH) + w2 (TH,dim) blocks
    biases = th * 4 * w_buf + dim * 4           # b1 chunk (f32) + b2 (f32, 1 buf)
    io = 2 * 2 * tm * dim * x_isz               # x + out tiles, double-buffered
    acc = tm * dim * 4                          # f32 accumulator scratch
    inter = tm * th * (4 + 4 + w_isz) + tm * dim * 4   # h, gelu, cast copy, dot2
    return weights + biases + io + acc + inter


def _select_tiling(m_pad, dim, hidden, x_isz, w_isz, budget):
    # Hidden-chunk candidates: fully resident first, then 128-aligned divisors
    # (streamed / reduction path for layers whose weights exceed the budget).
    th_cands = [hidden] + [t for t in (2048, 1024, 512, 256, 128)
                           if t < hidden and hidden % t == 0]
    tm_max = 1024 if x_isz <= 2 else 512
    tm_cands = []
    for c in (1024, 512, 256, 128):
        t = min(c, m_pad, tm_max)
        if t not in tm_cands:
            tm_cands.append(t)

    tm, th = tm_cands[-1], th_cands[-1]         # fallback: smallest combination
    done = False
    for cand_th in th_cands:
        nh = hidden // cand_th
        for cand_tm in tm_cands:
            if _footprint_bytes(cand_tm, cand_th, nh, dim, x_isz, w_isz) <= budget:
                tm, th, done = cand_tm, cand_th, True
                break
        if done:
            break

    # Megacore (v7x has 2 TCs): ensure the "parallel" M axis has >= 2 steps
    # whenever the input is big enough to split.
    if m_pad >= 256 and -(-m_pad // tm) == 1:
        tm = min(m_pad, _round_up(-(-m_pad // 2), 128))
    return tm, th


@functools.partial(jax.jit, static_argnames=("use_bf16_operands", "force_tiling"))
def feed_forward(x, w1, b1, w2, b2, *, use_bf16_operands=False, force_tiling=None):
    """FeedForward forward.  x: (batch, seq, dim); w: (in, out); b: (out,)."""
    batch, seq, dim = x.shape
    hidden = w1.shape[1]
    out_dtype = x.dtype
    m = batch * seq

    x2d = x.reshape(m, dim)
    if use_bf16_operands:
        # Optional numerics tradeoff: bf16 MXU operands (still f32 accumulate).
        x2d = x2d.astype(jnp.bfloat16)
        w1 = w1.astype(jnp.bfloat16)
        w2 = w2.astype(jnp.bfloat16)

    # Rows must be sublane-aligned (multiple of 8); pads at most 7 rows.
    m_pad = _round_up(m, 8)
    if m_pad != m:
        x2d = jnp.pad(x2d, ((0, m_pad - m), (0, 0)))

    # Pre-cast biases to f32 once (drops two per-step VPU cast passes).
    b1_f32 = b1.astype(jnp.float32).reshape(1, hidden)
    b2_f32 = b2.astype(jnp.float32).reshape(1, dim)

    x_isz = x2d.dtype.itemsize
    w_isz = w1.dtype.itemsize
    cap = _vmem_capacity_bytes()
    budget = int(cap * 0.82)

    if force_tiling is not None:
        tm, th = force_tiling
    else:
        tm, th = _select_tiling(m_pad, dim, hidden, x_isz, w_isz, budget)
    nh = hidden // th
    grid_m = -(-m_pad // tm)      # cdiv; trailing partial M block is masked

    fp = _footprint_bytes(tm, th, nh, dim, x_isz, w_isz)
    vmem_limit = min(cap, max(int(cap * 0.92), fp + 4 * 1024 * 1024))

    def spec(shape, index_map, single_buffer=False):
        if single_buffer:
            # Constant index map -> one resident VMEM buffer instead of two.
            return pl.BlockSpec(shape, index_map, pipeline_mode=pl.Buffered(1))
        return pl.BlockSpec(shape, index_map)

    resident = nh == 1
    in_specs = [
        spec((tm, dim), lambda i, k: (i, 0)),                          # x tile
        spec((dim, th), lambda i, k: (0, k), single_buffer=resident),  # w1 chunk
        spec((1, th), lambda i, k: (0, k), single_buffer=resident),    # b1 chunk
        spec((th, dim), lambda i, k: (k, 0), single_buffer=resident),  # w2 chunk
        spec((1, dim), lambda i, k: (0, 0), single_buffer=True),       # b2
    ]
    out_specs = spec((tm, dim), lambda i, k: (i, 0))

    cost = pl.CostEstimate(
        flops=4 * m_pad * dim * hidden,
        transcendentals=m_pad * hidden,
        bytes_accessed=(2 * dim * hidden * w_isz + (hidden + dim) * 4
                        + 2 * m_pad * dim * x_isz),
    )

    out = pl.pallas_call(
        _ffn_kernel,
        out_shape=jax.ShapeDtypeStruct((m_pad, dim), out_dtype),
        grid_spec=pltpu.PrefetchScalarGridSpec(
            num_scalar_prefetch=0,
            grid=(grid_m, nh),
            in_specs=in_specs,
            out_specs=out_specs,
            scratch_shapes=[pltpu.VMEM((tm, dim), jnp.float32)],
        ),
        compiler_params=pltpu.CompilerParams(
            dimension_semantics=("parallel", "arbitrary"),
            vmem_limit_bytes=vmem_limit,
        ),
        cost_estimate=cost,
    )(x2d, w1, b1_f32, w2, b2_f32)

    if m_pad != m:
        out = out[:m]
    return out.reshape(batch, seq, dim)


def _reference(x, w1, b1, w2, b2):
    h = jnp.einsum("bsd,dh->bsh", x, w1) + b1
    g = 0.5 * h * (1.0 + jax.lax.erf(h * _INV_SQRT2))
    return jnp.einsum("bsh,hd->bsd", g, w2) + b2


def _make_params(key, dim, hidden, dtype):
    kw1, kb1, kw2, kb2 = jax.random.split(key, 4)
    lim1 = 1.0 / jnp.sqrt(dim)
    lim2 = 1.0 / jnp.sqrt(hidden)
    w1 = jax.random.uniform(kw1, (dim, hidden), minval=-lim1, maxval=lim1).astype(dtype)
    b1 = jax.random.uniform(kb1, (hidden,), minval=-lim1, maxval=lim1).astype(dtype)
    w2 = jax.random.uniform(kw2, (hidden, dim), minval=-lim2, maxval=lim2).astype(dtype)
    b2 = jax.random.uniform(kb2, (dim,), minval=-lim2, maxval=lim2).astype(dtype)
    return w1, b1, w2, b2


if __name__ == "__main__":
    key = jax.random.PRNGKey(0)
    k0, k1, k2, k3 = jax.random.split(key, 4)

    # --- Test 1: small ViT-like shapes, weight-resident single-step path ---
    batch, seq, dim, hidden = 2, 8, 32, 64
    x = jax.random.normal(k0, (batch, seq, dim), dtype=jnp.float32)
    w1, b1, w2, b2 = _make_params(k1, dim, hidden, jnp.float32)
    out = feed_forward(x, w1, b1, w2, b2)
    jax.block_until_ready(out)
    ref = _reference(x, w1, b1, w2, b2)
    assert out.shape == (batch, seq, dim)
    assert jnp.allclose(out, ref, atol=1e-4, rtol=1e-4), "mismatch vs reference (test 1)"

    # --- Test 2: rows not 8-aligned (m = 111) -> pad-to-8 path ---
    batch2, seq2, dim2, hidden2 = 3, 37, 128, 256
    x2 = jax.random.normal(k2, (batch2, seq2, dim2), dtype=jnp.float32)
    w1b, b1b, w2b, b2b = _make_params(k3, dim2, hidden2, jnp.float32)
    out2 = feed_forward(x2, w1b, b1b, w2b, b2b)
    jax.block_until_ready(out2)
    ref2 = _reference(x2, w1b, b1b, w2b, b2b)
    assert out2.shape == (batch2, seq2, dim2)
    assert jnp.allclose(out2, ref2, atol=1e-3, rtol=1e-3), "mismatch vs reference (test 2)"

    # --- Test 3: forced hidden-axis reduction path (TH=128 -> 2 reduction steps) ---
    out3 = feed_forward(x2, w1b, b1b, w2b, b2b, force_tiling=(56, 128))
    jax.block_until_ready(out3)
    assert jnp.allclose(out3, ref2, atol=1e-3, rtol=1e-3), "mismatch vs reference (test 3)"

    # --- Test 4: forced partial trailing M block (m_pad=112, TM=64 -> 64 + 48) ---
    out4 = feed_forward(x2, w1b, b1b, w2b, b2b, force_tiling=(64, 256))
    jax.block_until_ready(out4)
    assert jnp.allclose(out4, ref2, atol=1e-3, rtol=1e-3), "mismatch vs reference (test 4)"

    # --- Test 5: optional bf16-operand MXU mode (numerics tradeoff, loose tol) ---
    out5 = feed_forward(x2, w1b, b1b, w2b, b2b, use_bf16_operands=True)
    jax.block_until_ready(out5)
    assert out5.shape == (batch2, seq2, dim2)
    assert jnp.allclose(out5, ref2, atol=1e-1, rtol=1e-1), "mismatch vs reference (test 5)"

    print("KERNEL_OK")
</pallas_src>

<mosaic_0001>
module attributes {stable_mosaic.version = 11 : i64} {
  func.func @_ffn_kernel(%arg0: i32, %arg1: i32, %arg2: memref<16x32xf32, #tpu.memory_space<vmem>>, %arg3: memref<32x64xf32, #tpu.memory_space<vmem>>, %arg4: memref<1x64xf32, #tpu.memory_space<vmem>>, %arg5: memref<64x32xf32, #tpu.memory_space<vmem>>, %arg6: memref<1x32xf32, #tpu.memory_space<vmem>>, %arg7: memref<16x32xf32, #tpu.memory_space<vmem>>, %arg8: memref<16x32xf32, #tpu.memory_space<vmem>>) attributes {dimension_semantics = [#tpu.dimension_semantics<parallel>, #tpu.dimension_semantics<arbitrary>], iteration_bounds = array<i64: 1, 1>, scalar_prefetch = 0 : i64, scratch_operands = 1 : i64, tpu.core_type = #tpu.core_type<tc>, window_params = [{transform_indices = @transform_0, window_bounds = array<i64: 16, 32>}, {pipeline_mode = #tpu.pipeline_mode<synchronous>, transform_indices = @transform_1, window_bounds = array<i64: 32, 64>}, {pipeline_mode = #tpu.pipeline_mode<synchronous>, transform_indices = @transform_2, window_bounds = array<i64: 1, 64>}, {pipeline_mode = #tpu.pipeline_mode<synchronous>, transform_indices = @transform_3, window_bounds = array<i64: 64, 32>}, {pipeline_mode = #tpu.pipeline_mode<synchronous>, transform_indices = @transform_4, window_bounds = array<i64: 1, 32>}, {transform_indices = @transform_5, window_bounds = array<i64: 16, 32>}]} {
    %c0_i32 = arith.constant 0 : i32
    %0 = arith.cmpi eq, %arg1, %c0_i32 : i32
    %1 = arith.extui %0 : i1 to i32
    %c0_i32_0 = arith.constant 0 : i32
    %2 = arith.cmpi ne, %1, %c0_i32_0 : i32
    scf.if %2 {
      %cst_18 = arith.constant 0.000000e+00 : f32
      %25 = vector.broadcast %cst_18 : f32 to vector<16x32xf32>
      %c0_19 = arith.constant 0 : index
      %c0_20 = arith.constant 0 : index
      %26 = vector.load %arg8[%c0_19, %c0_20] : memref<16x32xf32, #tpu.memory_space<vmem>>, vector<16x32xf32>
      tpu.vector_store %arg8[%c0_19, %c0_20], %25 {strides = array<i32>} : memref<16x32xf32, #tpu.memory_space<vmem>>, vector<16x32xf32>,
    } else {
    }
    %c0 = arith.constant 0 : index
    %c0_1 = arith.constant 0 : index
    %3 = vector.load %arg2[%c0, %c0_1] : memref<16x32xf32, #tpu.memory_space<vmem>>, vector<16x32xf32>
    %c0_2 = arith.constant 0 : index
    %c0_3 = arith.constant 0 : index
    %4 = vector.load %arg3[%c0_2, %c0_3] : memref<32x64xf32, #tpu.memory_space<vmem>>, vector<32x64xf32>
    %cst = arith.constant dense<0.000000e+00> : vector<16x64xf32>
    %5 = tpu.matmul %3, %4, %cst {dimension_numbers = #tpu.dot_dimension_numbers<[1], [0], [0], [1], [0, 0, 1, 1], [], []>} : vector<16x32xf32>, vector<32x64xf32>, vector<16x64xf32> -> vector<16x64xf32>
    %c0_4 = arith.constant 0 : index
    %c0_5 = arith.constant 0 : index
    %6 = vector.load %arg4[%c0_4, %c0_5] : memref<1x64xf32, #tpu.memory_space<vmem>>, vector<1x64xf32>
    %7 = vector.broadcast %6 : vector<1x64xf32> to vector<16x64xf32>
    %8 = arith.addf %5, %7 : vector<16x64xf32>
    %cst_6 = arith.constant 5.000000e-01 : f32
    %9 = vector.broadcast %cst_6 : f32 to vector<16x64xf32>
    %10 = arith.mulf %9, %8 : vector<16x64xf32>
    %cst_7 = arith.constant 0.707106769 : f32
    %11 = vector.broadcast %cst_7 : f32 to vector<16x64xf32>
    %12 = arith.mulf %8, %11 : vector<16x64xf32>
    %13 = math.erf %12 : vector<16x64xf32>
    %cst_8 = arith.constant 1.000000e+00 : f32
    %14 = vector.broadcast %cst_8 : f32 to vector<16x64xf32>
    %15 = arith.addf %14, %13 : vector<16x64xf32>
    %16 = arith.mulf %10, %15 : vector<16x64xf32>
    %c0_9 = arith.constant 0 : index
    %c0_10 = arith.constant 0 : index
    %17 = vector.load %arg8[%c0_9, %c0_10] : memref<16x32xf32, #tpu.memory_space<vmem>>, vector<16x32xf32>
    %c0_11 = arith.constant 0 : index
    %c0_12 = arith.constant 0 : index
    %18 = vector.load %arg5[%c0_11, %c0_12] : memref<64x32xf32, #tpu.memory_space<vmem>>, vector<64x32xf32>
    %cst_13 = arith.constant dense<0.000000e+00> : vector<16x32xf32>
    %19 = tpu.matmul %16, %18, %cst_13 {dimension_numbers = #tpu.dot_dimension_numbers<[1], [0], [0], [1], [0, 0, 1, 1], [], []>} : vector<16x64xf32>, vector<64x32xf32>, vector<16x32xf32> -> vector<16x32xf32>
    %20 = arith.addf %17, %19 : vector<16x32xf32>
    %c0_14 = arith.constant 0 : index
    %c0_15 = arith.constant 0 : index
    %21 = vector.load %arg8[%c0_14, %c0_15] : memref<16x32xf32, #tpu.memory_space<vmem>>, vector<16x32xf32>
    tpu.vector_store %arg8[%c0_14, %c0_15], %20 {strides = array<i32>} : memref<16x32xf32, #tpu.memory_space<vmem>>, vector<16x32xf32>,
    %c0_i32_16 = arith.constant 0 : i32
    %22 = arith.cmpi eq, %arg1, %c0_i32_16 : i32
    %23 = arith.extui %22 : i1 to i32
    %c0_i32_17 = arith.constant 0 : i32
    %24 = arith.cmpi ne, %23, %c0_i32_17 : i32
    scf.if %24 {
      %c0_18 = arith.constant 0 : index
      %c0_19 = arith.constant 0 : index
      %25 = vector.load %arg8[%c0_18, %c0_19] : memref<16x32xf32, #tpu.memory_space<vmem>>, vector<16x32xf32>
      %c0_20 = arith.constant 0 : index
      %c0_21 = arith.constant 0 : index
      %26 = vector.load %arg6[%c0_20, %c0_21] : memref<1x32xf32, #tpu.memory_space<vmem>>, vector<1x32xf32>
      %27 = vector.broadcast %26 : vector<1x32xf32> to vector<16x32xf32>
      %28 = arith.addf %25, %27 : vector<16x32xf32>
      %c0_22 = arith.constant 0 : index
      %c0_23 = arith.constant 0 : index
      %29 = vector.load %arg7[%c0_22, %c0_23] : memref<16x32xf32, #tpu.memory_space<vmem>>, vector<16x32xf32>
      tpu.vector_store %arg7[%c0_22, %c0_23], %28 {strides = array<i32>} : memref<16x32xf32, #tpu.memory_space<vmem>>, vector<16x32xf32>,
    } else {
    }
    return
  }
  func.func @transform_0(%arg0: i32, %arg1: i32) -> (i32, i32) {
    %c0_i32 = arith.constant 0 : i32
    %c0_i32_0 = arith.constant 0 : i32
    return %arg0, %c0_i32 : i32, i32
  }
  func.func @transform_1(%arg0: i32, %arg1: i32) -> (i32, i32) {
    %c0_i32 = arith.constant 0 : i32
    %c0_i32_0 = arith.constant 0 : i32
    return %c0_i32, %arg1 : i32, i32
  }
  func.func @transform_2(%arg0: i32, %arg1: i32) -> (i32, i32) {
    %c0_i32 = arith.constant 0 : i32
    %c0_i32_0 = arith.constant 0 : i32
    return %c0_i32, %arg1 : i32, i32
  }
  func.func @transform_3(%arg0: i32, %arg1: i32) -> (i32, i32) {
    %c0_i32 = arith.constant 0 : i32
    %c0_i32_0 = arith.constant 0 : i32
    return %arg1, %c0_i32 : i32, i32
  }
  func.func @transform_4(%arg0: i32, %arg1: i32) -> (i32, i32) {
    %c0_i32 = arith.constant 0 : i32
    %c0_i32_0 = arith.constant 0 : i32
    %c0_i32_1 = arith.constant 0 : i32
    return %c0_i32, %c0_i32_0 : i32, i32
  }
  func.func @transform_5(%arg0: i32, %arg1: i32) -> (i32, i32) {
    %c0_i32 = arith.constant 0 : i32
    %c0_i32_0 = arith.constant 0 : i32
    return %arg0, %c0_i32 : i32, i32
  }
}

</mosaic_0001>

<llo_original>
// kernel: feed_forward.1
$region0: #{feed_forward.1}
  #allocation0 [shape = 'u32[]', space=smem, size = 0x4, offset = 0x4, fixed_abs, tag = 'smem constant byte address 0x4 - core index']
  #allocation1 [shape = 'u32[144,128]{1,0:T(1,128)}', space=vmem, size = 0x12000, scoped, tag = 'internal scratch']
  #allocation2 [shape = 'f32[16,32]{1,0:T(8,128)}', space=vmem, size = 0x2000, scoped, tag = 'scratch operand']
  %s0 = inlined_call_operand.vmem [shape: f32[16,32], index: 0, kind: input, shape index: {}]
  %s1 = inlined_call_operand.vmem [shape: f32[32,64], index: 1, kind: input, shape index: {}]
  %s2 = inlined_call_operand.vmem [shape: f32[1,64], index: 2, kind: input, shape index: {}]
  %s3 = inlined_call_operand.vmem [shape: f32[64,32], index: 3, kind: input, shape index: {}]
  %s4 = inlined_call_operand.vmem [shape: f32[1,32], index: 4, kind: input, shape index: {}]
  %s5 = inlined_call_operand.hbm [shape: f32[16,32], index: 5, kind: output, shape index: {}]
  %s6 = sld [smem:[#allocation0]]
  $region38: #{feed_forward.1} parent=0
    _
  %s8 = ssub.s32 1, %s6
  %s9 = scalar_select 0, %s8, %s6
  $region1: #{feed_forward.1} parent=0
    #allocation3 [shape = 'u8[8192]{0}', space=vmem, size = 0x2000, scoped, tag = 'output window, operand 0, single buffered']
    #allocation4 [shape = 's32[1]{0}', space=sflag, size = 0x4, scoped, tag = 'scoped memory for feed_forward.1']
    %10 = vsyncpa [#allocation4], 0
    // Predicated region
    $region2: #{feed_forward.1} parent=1 // pred_check
      _
    $region3: #{feed_forward.1} parent=1 // pred_check_branch
      %12 = sbr.rel (0) target = $region5
    $region4: #{feed_forward.1} parent=1 // pred_region
      _
    $region5: #{feed_forward.1} parent=1 // pred_fallthru
      _
    // Predicated region
    $region6: #{feed_forward.1} parent=1 // pred_check
      _
    $region7: #{feed_forward.1} parent=1 // pred_check_branch
      %14 = sbr.rel (0) target = $region9
    $region8: #{feed_forward.1} parent=1 // pred_region
      _
    $region9: #{feed_forward.1} parent=1 // pred_fallthru
      _
    // Predicated region
    $region10: #{feed_forward.1} parent=1 // pred_check
      _
    $region11: #{feed_forward.1} parent=1 // pred_check_branch
      %16 = sbr.rel (0) target = $region13
    $region12: #{feed_forward.1} parent=1 // pred_region
      _
    $region13: #{feed_forward.1} parent=1 // pred_fallthru
      _
    // Predicated region
    $region14: #{feed_forward.1} parent=1 // pred_check
      _
    $region15: #{feed_forward.1} parent=1 // pred_check_branch
      %18 = sbr.rel (0) target = $region17
    $region16: #{feed_forward.1} parent=1 // pred_region
      _
    $region17: #{feed_forward.1} parent=1 // pred_fallthru
      _
    // Predicated region
    $region18: #{feed_forward.1} parent=1 // pred_check
      _
    $region19: #{feed_forward.1} parent=1 // pred_check_branch
      %20 = sbr.rel (0) target = $region21
    $region20: #{feed_forward.1} parent=1 // pred_region
      _
    $region21: #{feed_forward.1} parent=1 // pred_fallthru
      _
    %p21 = scmp.eq.s32.totalorder 0, 0
    // Predicated region
    $region22: #{feed_forward.1} parent=1 // pred_check
      %p22 = pneg %p21
    $region23: #{feed_forward.1} parent=1 // pred_check_branch
      %24 = sbr.rel (%p22) target = $region25
    $region24: #{feed_forward.1} parent=1 // pred_region
      %vm25 = vcmask 261120
      %26 = vst.msk [vmem:[#allocation2] sm:$0xff] %vm25, 0.0
      %27 = vst.msk [vmem:[#allocation2 + $0x8] sm:$0xff] %vm25, 0.0
    $region25: #{feed_forward.1} parent=1 // pred_fallthru
      _
    %v28 = vld [vmem:[%s0] sm:$0xff]
    %v29 = vld [vmem:[%s0 + $0x8] sm:$0xff]
    %v30 = vld [vmem:[%s1] sm:$0xff]
    %v31 = vld [vmem:[%s1 + $0x8] sm:$0xff]
    %v32 = vld [vmem:[%s1 + $0x10] sm:$0xff]
    %v33 = vld [vmem:[%s1 + $0x18] sm:$0xff]
    %v34 = vld [vmem:[%s2] sm:$0x1]
    %v36 = vlaneseq
    %v37 = vshrl.u32 %v36, 7
    %v38 = vsub.s32 0, %v37
    %v39 = vrot.slane %v34, %v38
    %vm41 = vcmask 261120
    %v43 = vsel %vm41, %v28, 0
    %v46 = vsel %vm41, %v29, 0
    %48 = vmatprep.subr.mxu0 0.0
    %49 = vmatpush1.msra.mxu0 %v30
    %50 = vmatprep.subr.mxu0 0.0
    %51 = vmatpush1.msra.mxu0 %v31
    %52 = vmatprep.subr.mxu0 0.0
    %53 = vmatpush1.msra.mxu0 %v32
    %54 = vmatprep.subr.mxu0 0.0
    %55 = vmatpush1.msra.mxu0 %v33
    %56 = vmatprep.subr.mxu0 0.0
    %57 = vmatpush1.msra.mxu0 0.0
    %58 = vmatprep.subr.mxu0 0.0
    %59 = vmatpush1.msra.mxu0 0.0
    %60 = vmatprep.subr.mxu0 0.0
    %61 = vmatpush1.msra.mxu0 0.0
    %62 = vmatprep.subr.mxu0 0.0
    %63 = vmatpush1.msra.mxu0 0.0
    %64 = vmatprep.subr.mxu0 0.0
    %65 = vmatpush1.msra.mxu0 0.0
    %66 = vmatprep.subr.mxu0 0.0
    %67 = vmatpush1.msra.mxu0 0.0
    %68 = vmatprep.subr.mxu0 0.0
    %69 = vmatpush1.msra.mxu0 0.0
    %70 = vmatprep.subr.mxu0 0.0
    %71 = vmatpush1.msra.mxu0 0.0
    %72 = vmatprep.subr.mxu0 0.0
    %73 = vmatpush1.msra.mxu0 0.0
    %74 = vmatprep.subr.mxu0 0.0
    %75 = vmatpush1.msra.mxu0 0.0
    %76 = vmatprep.subr.mxu0 0.0
    %77 = vmatpush1.msra.mxu0 0.0
    %78 = vmatprep.subr.mxu0 0.0
    %79 = vmatpush1.msra.mxu0 0.0
    %80 = vmatprep.subr.mxu0 0.0
    %81 = vmatpush1.msra.mxu0 0.0
    %82 = vmatprep.subr.mxu0 0.0
    %83 = vmatpush1.msra.mxu0 0.0
    %84 = vmatprep.subr.mxu0 0.0
    %85 = vmatpush1.msra.mxu0 0.0
    %86 = vmatprep.subr.mxu0 0.0
    %87 = vmatpush1.msra.mxu0 0.0
    %88 = vmatprep.subr.mxu0 0.0
    %89 = vmatpush1.msra.mxu0 0.0
    %90 = vmatprep.subr.mxu0 0.0
    %91 = vmatpush1.msra.mxu0 0.0
    %92 = vmatprep.subr.mxu0 0.0
    %93 = vmatpush1.msra.mxu0 0.0
    %94 = vmatprep.subr.mxu0 0.0
    %95 = vmatpush1.msra.mxu0 0.0
    %96 = vmatprep.subr.mxu0 0.0
    %97 = vmatpush1.msra.mxu0 0.0
    %98 = vmatprep.subr.mxu0 0.0
    %99 = vmatpush1.msra.mxu0 0.0
    %100 = vmatprep.subr.mxu0 0.0
    %101 = vmatpush1.msra.mxu0 0.0
    %102 = vmatprep.subr.mxu0 0.0
    %103 = vmatpush1.msra.mxu0 0.0
    %104 = vmatprep.subr.mxu0 0.0
    %105 = vmatpush1.msra.mxu0 0.0
    %106 = vmatprep.subr.mxu0 0.0
    %107 = vmatpush1.msra.mxu0 0.0
    %108 = vmatprep.subr.mxu0 0.0
    %109 = vmatpush1.msra.mxu0 0.0
    %110 = vmatprep.subr.mxu0 0.0
    %111 = vmatpush1.msra.mxu0 0.0
    %112 = vmatprep.mubr.f32.mxu0 0.0
    %113 = vmatmul.mubr.f32.gmra.mrb[0].mxu0 %v43
    %v114 = vpop.f32.mrb[0].mxu0
    %v115 = vadd.f32 %v39, %v114
    %v116 = vpop.f32.mrb[0].mxu0
    %117 = vmatprep.mubr.f32.mxu0 0.0
    %118 = vmatmul.mubr.f32.gmra.mrb[0].mxu0 %v46
    %v119 = vpop.f32.mrb[0].mxu0
    %v120 = vadd.f32 %v39, %v119
    %v121 = vpop.f32.mrb[0].mxu0
    %122 = vdwg.mxu0
    %v123 = vmul.f32 %v115, 0.5
    %v124 = vmul.f32 %v120, 0.5
    %v125 = vmul.f32 %v115, 0.70710677
    %v126 = vmul.f32 %v120, 0.70710677
    %v127 = verf.f32.pop %v125
    %v128 = verf.f32.pop %v126
    %v129 = vadd.f32 %v127, 1.0
    %v130 = vadd.f32 %v128, 1.0
    %v131 = vmul.f32 %v123, %v129
    %v132 = vmul.f32 %v124, %v130
    %v133 = vld [vmem:[#allocation2] sm:$0xff]
    %v134 = vld [vmem:[#allocation2 + $0x8] sm:$0xff]
    %v135 = vld [vmem:[%s3] sm:$0xff]
    %v136 = vld [vmem:[%s3 + $0x8] sm:$0xff]
    %v137 = vld [vmem:[%s3 + $0x10] sm:$0xff]
    %v138 = vld [vmem:[%s3 + $0x18] sm:$0xff]
    %v139 = vld [vmem:[%s3 + $0x20] sm:$0xff]
    %v140 = vld [vmem:[%s3 + $0x28] sm:$0xff]
    %v141 = vld [vmem:[%s3 + $0x30] sm:$0xff]
    %v142 = vld [vmem:[%s3 + $0x38] sm:$0xff]
    %vm143 = vcmask 523264
    %v145 = vsel %vm143, %v131, 0
    %v148 = vsel %vm143, %v132, 0
    %150 = vmatprep.subr.mxu0 0.0
    %151 = vmatpush1.msra.mxu0 %v135
    %152 = vmatprep.subr.mxu0 0.0
    %153 = vmatpush1.msra.mxu0 %v136
    %154 = vmatprep.subr.mxu0 0.0
    %155 = vmatpush1.msra.mxu0 %v137
    %156 = vmatprep.subr.mxu0 0.0
    %157 = vmatpush1.msra.mxu0 %v138
    %158 = vmatprep.subr.mxu0 0.0
    %159 = vmatpush1.msra.mxu0 %v139
    %160 = vmatprep.subr.mxu0 0.0
    %161 = vmatpush1.msra.mxu0 %v140
    %162 = vmatprep.subr.mxu0 0.0
    %163 = vmatpush1.msra.mxu0 %v141
    %164 = vmatprep.subr.mxu0 0.0
    %165 = vmatpush1.msra.mxu0 %v142
    %166 = vmatprep.subr.mxu0 0.0
    %167 = vmatpush1.msra.mxu0 0.0
    %168 = vmatprep.subr.mxu0 0.0
    %169 = vmatpush1.msra.mxu0 0.0
    %170 = vmatprep.subr.mxu0 0.0
    %171 = vmatpush1.msra.mxu0 0.0
    %172 = vmatprep.subr.mxu0 0.0
    %173 = vmatpush1.msra.mxu0 0.0
    %174 = vmatprep.subr.mxu0 0.0
    %175 = vmatpush1.msra.mxu0 0.0
    %176 = vmatprep.subr.mxu0 0.0
    %177 = vmatpush1.msra.mxu0 0.0
    %178 = vmatprep.subr.mxu0 0.0
    %179 = vmatpush1.msra.mxu0 0.0
    %180 = vmatprep.subr.mxu0 0.0
    %181 = vmatpush1.msra.mxu0 0.0
    %182 = vmatprep.subr.mxu0 0.0
    %183 = vmatpush1.msra.mxu0 0.0
    %184 = vmatprep.subr.mxu0 0.0
    %185 = vmatpush1.msra.mxu0 0.0
    %186 = vmatprep.subr.mxu0 0.0
    %187 = vmatpush1.msra.mxu0 0.0
    %188 = vmatprep.subr.mxu0 0.0
    %189 = vmatpush1.msra.mxu0 0.0
    %190 = vmatprep.subr.mxu0 0.0
    %191 = vmatpush1.msra.mxu0 0.0
    %192 = vmatprep.subr.mxu0 0.0
    %193 = vmatpush1.msra.mxu0 0.0
    %194 = vmatprep.subr.mxu0 0.0
    %195 = vmatpush1.msra.mxu0 0.0
    %196 = vmatprep.subr.mxu0 0.0
    %197 = vmatpush1.msra.mxu0 0.0
    %198 = vmatprep.subr.mxu0 0.0
    %199 = vmatpush1.msra.mxu0 0.0
    %200 = vmatprep.subr.mxu0 0.0
    %201 = vmatpush1.msra.mxu0 0.0
    %202 = vmatprep.subr.mxu0 0.0
    %203 = vmatpush1.msra.mxu0 0.0
    %204 = vmatprep.subr.mxu0 0.0
    %205 = vmatpush1.msra.mxu0 0.0
    %206 = vmatprep.subr.mxu0 0.0
    %207 = vmatpush1.msra.mxu0 0.0
    %208 = vmatprep.subr.mxu0 0.0
    %209 = vmatpush1.msra.mxu0 0.0
    %210 = vmatprep.subr.mxu0 0.0
    %211 = vmatpush1.msra.mxu0 0.0
    %212 = vmatprep.subr.mxu0 0.0
    %213 = vmatpush1.msra.mxu0 0.0
    %214 = vmatprep.mubr.f32.mxu0 0.0
    %215 = vmatmul.mubr.f32.gmra.mrb[0].mxu0 %v145
    %v216 = vpop.f32.mrb[0].mxu0
    %v217 = vadd.f32 0.0, %v216
    %v218 = vpop.f32.mrb[0].mxu0
    %219 = vmatprep.mubr.f32.mxu0 0.0
    %220 = vmatmul.mubr.f32.gmra.mrb[0].mxu0 %v148
    %v221 = vpop.f32.mrb[0].mxu0
    %v222 = vadd.f32 0.0, %v221
    %v223 = vpop.f32.mrb[0].mxu0
    %224 = vdwg.mxu0
    %v225 = vadd.f32 %v133, %v217
    %v226 = vadd.f32 %v134, %v222
    %227 = vst.msk [vmem:[#allocation2] sm:$0xff] %vm41, %v225
    %228 = vst.msk [vmem:[#allocation2 + $0x8] sm:$0xff] %vm41, %v226
    // Predicated region
    $region26: #{feed_forward.1} parent=1 // pred_check
      %p229 = pneg %p21
    $region27: #{feed_forward.1} parent=1 // pred_check_branch
      %231 = sbr.rel (%p229) target = $region29
    $region28: #{feed_forward.1} parent=1 // pred_region
      %v232 = vld [vmem:[#allocation2] sm:$0xff]
      %v233 = vld [vmem:[#allocation2 + $0x8] sm:$0xff]
      %v234 = vld [vmem:[%s4] sm:$0x1]
      %v236 = vlaneseq
      %v237 = vshrl.u32 %v236, 7
      %v238 = vsub.s32 0, %v237
      %v239 = vrot.slane %v234, %v238
      %v241 = vadd.f32 %v232, %v239
      %v242 = vadd.f32 %v233, %v239
      %243 = vst.msk [vmem:[#allocation3] sm:$0xff] %vm41, %v241
      %244 = vst.msk [vmem:[#allocation3 + $0x8] sm:$0xff] %vm41, %v242
    $region29: #{feed_forward.1} parent=1 // pred_fallthru
      _
    // Predicated region
    $region30: #{feed_forward.1} parent=1 // pred_check
      _
    $region31: #{feed_forward.1} parent=1 // pred_check_branch
      %246 = sbr.rel (0) target = $region33
    $region32: #{feed_forward.1} parent=1 // pred_region
      %s248 = ssub.s32 256, 256
      %249 = vsyncadd [#allocation4], %s248
      %s250 = sshll.u32 [#allocation3], 4
      %s251 = int_to_ptr.vmem [resolvable:$true] %s250
      %256 = dma.vmem_to_hbm [thread:$0]  %s251, 256, %s5, [#allocation4], 128, 128, 8
    $region33: #{feed_forward.1} parent=1 // pred_fallthru
      _
    // Predicated region
    $region34: #{feed_forward.1} parent=1 // pred_check
      _
    $region35: #{feed_forward.1} parent=1 // pred_check_branch
      %258 = sbr.rel (0) target = $region37
    $region36: #{feed_forward.1} parent=1 // pred_region
      %259 = dma.done [#allocation4], 256
    $region37: #{feed_forward.1} parent=1 // pred_fallthru
      _
    %260 = vsyncpa [#allocation4], 1

</llo_original>
